<compile_context>
chip_gen: v6e
topology: v6e:2x2x1
jax: 0.10.0
libtpu: 0.0.40
codegen_flags: <defaults>
</compile_context>

<pallas_src>
import math

import jax
import jax.numpy as jnp
from jax.experimental import pallas as pl
from jax.experimental.pallas import tpu as pltpu


# ----------------------------------------------------------------------------
# Glue helpers (plain JAX, run once in the wrapper)
# ----------------------------------------------------------------------------
def _interp_matrix(out_size, in_size, dtype=jnp.float32):
    """Row-stochastic (out_size, in_size) bilinear interpolation matrix, align_corners=True."""
    if in_size == out_size:
        return jnp.eye(out_size, dtype=dtype)
    if out_size == 1:
        m = jnp.zeros((1, in_size), dtype)
        return m.at[0, 0].set(1.0)
    pos = jnp.linspace(0.0, float(in_size - 1), out_size)
    lo = jnp.clip(jnp.floor(pos).astype(jnp.int32), 0, in_size - 1)
    hi = jnp.clip(lo + 1, 0, in_size - 1)
    frac = (pos - lo.astype(jnp.float32)).astype(dtype)
    rows = jnp.arange(out_size)
    m = jnp.zeros((out_size, in_size), dtype)
    m = m.at[rows, lo].add(1.0 - frac)
    m = m.at[rows, hi].add(frac)
    return m


def _pick_hw_tile(hw, c, bb, budget_bytes=8 * 1024 * 1024):
    """Largest HW tile (divisor of hw) whose double-buffered bf16 F tile fits the budget."""
    per_row = max(1, 2 * bb * c * 2)           # 2 buffers * bb * C * 2 bytes(bf16)
    max_thw = max(512, budget_bytes // per_row)
    if hw <= max_thw:
        return hw
    t = (max_thw // 512) * 512                 # keep tiles multiples of 512 (layout-safe)
    while t >= 512:
        if hw % t == 0:
            return t
        t -= 512
    # TODO(synk): ragged HW with no friendly divisor falls back to a single (large) tile.
    return hw


# ----------------------------------------------------------------------------
# Pallas kernel: out[b, :] += wa[b, hw_tile] @ F_nhwc[b, hw_tile, :]  (f32 accumulate)
# ----------------------------------------------------------------------------
def _wsll_kernel(wa_ref, f_ref, b_ref, o_ref, acc_ref):
    # wa_ref : (bb, thw)     f32  -- conv_w/(H*W)-folded, upsampled attention
    # f_ref  : (bb, thw, C)  bf16 -- NHWC features
    # b_ref  : (1, 1)        f32  -- Conv1d bias
    # o_ref  : (bb, C)       f32  -- output rows
    # acc_ref: (bb, C)       f32  -- VMEM partial sums over HW tiles
    k = pl.program_id(1)

    @pl.when(k == 0)
    def _():
        acc_ref[...] = jnp.zeros_like(acc_ref)

    wa = wa_ref[...].astype(jnp.bfloat16)[:, None, :]            # (bb, 1, thw), tiny cast
    part = jnp.einsum('bmh,bhc->bmc', wa, f_ref[...],
                      preferred_element_type=jnp.float32)         # (bb, 1, C) on MXU
    acc_ref[...] += part[:, 0, :]

    @pl.when(k == pl.num_programs(1) - 1)
    def _():
        o_ref[...] = (acc_ref[...] + b_ref[...]).astype(o_ref.dtype)


def wsll_forward(feat7, attention_MS, conv_w, conv_b):
    """Weakly_Supervised_Lesion_Localization.forward.

    feat7:        (B, C, H, W)   float32
    attention_MS: (B, M, AH, AW) float32
    conv_w:       (1, M)  Conv1d(M, 1, kernel=1) weight (squeezed)
    conv_b:       (1, 1)  Conv1d bias
    returns:      (B, C) float32
    """
    B, C, H, W = feat7.shape
    _, M, AH, AW = attention_MS.shape
    HW = H * W

    # --- Fold Conv1d weight and the 1/(H*W) normalization into the attention maps
    #     on the coarse grid (M-fold reduction of downstream work). ---------------
    w_scaled = conv_w.astype(jnp.float32).reshape(M) * (1.0 / float(HW))          # (M,)
    wa_small = jnp.einsum('m,bmhw->bhw', w_scaled,
                          attention_MS.astype(jnp.float32))                        # (B, AH, AW)

    # --- Bilinear upsample (align_corners=True) of the single folded map per batch
    #     via separable interpolation matmuls (no gathers). -----------------------
    if (AH, AW) != (H, W):
        Uy = _interp_matrix(H, AH)                                                 # (H, AH)
        Ux = _interp_matrix(W, AW)                                                 # (W, AW)
        wa = jnp.einsum('ha,baw,vw->bhv', Uy, wa_small, Ux)                        # (B, H, W)
    else:
        wa = wa_small
    wa = wa.reshape(B, HW)                                                         # f32, tiny

    # --- NHWC, bf16 features: HW on sublanes, C lane-dense; halves HBM traffic. ---
    f_nhwc = jnp.transpose(feat7, (0, 2, 3, 1)).reshape(B, HW, C).astype(jnp.bfloat16)
    bias = conv_b.astype(jnp.float32).reshape(1, 1)

    # --- Tiling: batch-block bb per step, HW tiled as the reduction axis. --------
    bb = B if (B <= 8 or B % 8 != 0) else 8
    thw = _pick_hw_tile(HW, C, bb)
    grid = (B // bb, HW // thw)

    return pl.pallas_call(
        _wsll_kernel,
        out_shape=jax.ShapeDtypeStruct((B, C), jnp.float32),
        grid_spec=pltpu.PrefetchScalarGridSpec(
            num_scalar_prefetch=0,
            grid=grid,
            in_specs=[
                pl.BlockSpec((bb, thw), lambda i, k: (i, k)),        # wa
                pl.BlockSpec((bb, thw, C), lambda i, k: (i, k, 0)),  # features (NHWC)
                pl.BlockSpec((1, 1), lambda i, k: (0, 0)),           # bias
            ],
            out_specs=pl.BlockSpec((bb, C), lambda i, k: (i, 0)),
            scratch_shapes=[pltpu.VMEM((bb, C), jnp.float32)],
        ),
        compiler_params=pltpu.CompilerParams(
            dimension_semantics=("parallel", "arbitrary")),
    )(wa, f_nhwc, bias)


# ----------------------------------------------------------------------------
# Pure-JAX reference mirroring the PyTorch forward (independent gather-based upsample)
# ----------------------------------------------------------------------------
def _upsample_bilinear_align_corners(x, H, W):
    B, M, AH, AW = x.shape
    if AH == H and AW == W:
        return x
    ys = jnp.linspace(0.0, float(AH - 1), H) if H > 1 else jnp.zeros((H,), jnp.float32)
    xs = jnp.linspace(0.0, float(AW - 1), W) if W > 1 else jnp.zeros((W,), jnp.float32)
    y0 = jnp.clip(jnp.floor(ys).astype(jnp.int32), 0, AH - 1)
    y1 = jnp.clip(y0 + 1, 0, AH - 1)
    x0 = jnp.clip(jnp.floor(xs).astype(jnp.int32), 0, AW - 1)
    x1 = jnp.clip(x0 + 1, 0, AW - 1)
    wy = (ys - y0.astype(ys.dtype))[:, None]
    wx = (xs - x0.astype(xs.dtype))[None, :]
    a = x[:, :, y0][:, :, :, x0]
    b = x[:, :, y0][:, :, :, x1]
    c = x[:, :, y1][:, :, :, x0]
    d = x[:, :, y1][:, :, :, x1]
    top = a * (1.0 - wx) + b * wx
    bot = c * (1.0 - wx) + d * wx
    return top * (1.0 - wy) + bot * wy


def wsll_reference(feat7, attention_MS, conv_w, conv_b):
    B, C, H, W = feat7.shape
    att = _upsample_bilinear_align_corners(attention_MS, H, W)
    fm = jnp.einsum('imjk,injk->imn', att, feat7) / float(H * W)           # (B, M, C)
    out = jnp.einsum('om,imn->ion', conv_w, fm) + conv_b[None, :, :]       # (B, 1, C)
    return out.reshape(B, C)


if __name__ == "__main__":
    key = jax.random.PRNGKey(0)
    k_feat, k_att, k_w, k_b = jax.random.split(key, 4)

    # Small shapes consistent with the module (exercises the upsample branch).
    B, C, H, W = 2, 16, 16, 16      # feat7
    M, AH, AW = 8, 8, 8             # attention maps

    feat7 = jax.random.normal(k_feat, (B, C, H, W), dtype=jnp.float32)
    attention_MS = jax.nn.relu(
        jax.random.normal(k_att, (B, M, AH, AW), dtype=jnp.float32))

    # Conv1d(M -> 1, kernel_size=1) params, PyTorch default-uniform-style bounds.
    # (the module's _init_weights does not touch Conv1d, so default init applies)
    bound = 1.0 / math.sqrt(M)
    conv_w = jax.random.uniform(k_w, (1, M), jnp.float32, -bound, bound)
    conv_b = jax.random.uniform(k_b, (1, 1), jnp.float32, -bound, bound)

    out = jax.block_until_ready(wsll_forward(feat7, attention_MS, conv_w, conv_b))
    ref = wsll_reference(feat7, attention_MS, conv_w, conv_b)

    assert out.shape == (B, C), out.shape
    # bf16 feature path -> looser tolerance than pure-f32.
    assert jnp.allclose(out, ref, atol=2e-2, rtol=2e-2), (
        f"max abs err {jnp.max(jnp.abs(out - ref))}")

    print("KERNEL_OK")
</pallas_src>

<mosaic_0001>
module attributes {stable_mosaic.version = 11 : i64} {
  func.func @_wsll_kernel(%arg0: i32, %arg1: i32, %arg2: memref<2x256xf32, #tpu.memory_space<vmem>>, %arg3: memref<2x256x16xbf16, #tpu.memory_space<vmem>>, %arg4: memref<1x1xf32, #tpu.memory_space<vmem>>, %arg5: memref<2x16xf32, #tpu.memory_space<vmem>>, %arg6: memref<2x16xf32, #tpu.memory_space<vmem>>) attributes {dimension_semantics = [#tpu.dimension_semantics<parallel>, #tpu.dimension_semantics<arbitrary>], iteration_bounds = array<i64: 1, 1>, scalar_prefetch = 0 : i64, scratch_operands = 1 : i64, tpu.core_type = #tpu.core_type<tc>, window_params = [{transform_indices = @transform_0, window_bounds = array<i64: 2, 256>}, {transform_indices = @transform_1, window_bounds = array<i64: 2, 256, 16>}, {pipeline_mode = #tpu.pipeline_mode<synchronous>, transform_indices = @transform_2, window_bounds = array<i64: 1, 1>}, {transform_indices = @transform_3, window_bounds = array<i64: 2, 16>}]} {
    %c0_i32 = arith.constant 0 : i32
    %0 = arith.cmpi eq, %arg1, %c0_i32 : i32
    %1 = arith.extui %0 : i1 to i32
    %c0_i32_0 = arith.constant 0 : i32
    %2 = arith.cmpi ne, %1, %c0_i32_0 : i32
    scf.if %2 {
      %cst_11 = arith.constant 0.000000e+00 : f32
      %15 = vector.broadcast %cst_11 : f32 to vector<2x16xf32>
      %c0_12 = arith.constant 0 : index
      %c0_13 = arith.constant 0 : index
      %16 = vector.load %arg6[%c0_12, %c0_13] : memref<2x16xf32, #tpu.memory_space<vmem>>, vector<2x16xf32>
      tpu.vector_store %arg6[%c0_12, %c0_13], %15 {strides = array<i32>} : memref<2x16xf32, #tpu.memory_space<vmem>>, vector<2x16xf32>,
    } else {
    }
    %c0 = arith.constant 0 : index
    %c0_1 = arith.constant 0 : index
    %3 = vector.load %arg2[%c0, %c0_1] : memref<2x256xf32, #tpu.memory_space<vmem>>, vector<2x256xf32>
    %4 = arith.truncf %3 : vector<2x256xf32> to vector<2x256xbf16>
    %5 = vector.shape_cast %4 : vector<2x256xbf16> to vector<2x1x256xbf16>
    %c0_2 = arith.constant 0 : index
    %c0_3 = arith.constant 0 : index
    %c0_4 = arith.constant 0 : index
    %6 = vector.load %arg3[%c0_2, %c0_3, %c0_4] : memref<2x256x16xbf16, #tpu.memory_space<vmem>>, vector<2x256x16xbf16>
    "tpu.trace_start"() <{level = 10 : i32, message = "bmh,bhc->bmc"}> : () -> ()
    %cst = arith.constant dense<0.000000e+00> : vector<2x1x16xf32>
    %7 = tpu.matmul %5, %6, %cst {dimension_numbers = #tpu.dot_dimension_numbers<[2], [1], [1], [2], [0, 0, 0, 1, 1, 2], [0], [0]>} : vector<2x1x256xbf16>, vector<2x256x16xbf16>, vector<2x1x16xf32> -> vector<2x1x16xf32>
    "tpu.trace_stop"() : () -> ()
    %c0_5 = arith.constant 0 : index
    %c0_6 = arith.constant 0 : index
    %8 = vector.load %arg6[%c0_5, %c0_6] : memref<2x16xf32, #tpu.memory_space<vmem>>, vector<2x16xf32>
    %9 = vector.shape_cast %7 : vector<2x1x16xf32> to vector<2x16xf32>
    %10 = arith.addf %8, %9 : vector<2x16xf32>
    %c0_7 = arith.constant 0 : index
    %c0_8 = arith.constant 0 : index
    %11 = vector.load %arg6[%c0_7, %c0_8] : memref<2x16xf32, #tpu.memory_space<vmem>>, vector<2x16xf32>
    tpu.vector_store %arg6[%c0_7, %c0_8], %10 {strides = array<i32>} : memref<2x16xf32, #tpu.memory_space<vmem>>, vector<2x16xf32>,
    %c0_i32_9 = arith.constant 0 : i32
    %12 = arith.cmpi eq, %arg1, %c0_i32_9 : i32
    %13 = arith.extui %12 : i1 to i32
    %c0_i32_10 = arith.constant 0 : i32
    %14 = arith.cmpi ne, %13, %c0_i32_10 : i32
    scf.if %14 {
      %c0_11 = arith.constant 0 : index
      %c0_12 = arith.constant 0 : index
      %15 = vector.load %arg6[%c0_11, %c0_12] : memref<2x16xf32, #tpu.memory_space<vmem>>, vector<2x16xf32>
      %c0_13 = arith.constant 0 : index
      %c0_14 = arith.constant 0 : index
      %16 = vector.load %arg4[%c0_13, %c0_14] : memref<1x1xf32, #tpu.memory_space<vmem>>, vector<1x1xf32>
      %17 = vector.broadcast %16 : vector<1x1xf32> to vector<2x16xf32>
      %18 = arith.addf %15, %17 : vector<2x16xf32>
      %c0_15 = arith.constant 0 : index
      %c0_16 = arith.constant 0 : index
      %19 = vector.load %arg5[%c0_15, %c0_16] : memref<2x16xf32, #tpu.memory_space<vmem>>, vector<2x16xf32>
      tpu.vector_store %arg5[%c0_15, %c0_16], %18 {strides = array<i32>} : memref<2x16xf32, #tpu.memory_space<vmem>>, vector<2x16xf32>,
    } else {
    }
    return
  }
  func.func @transform_0(%arg0: i32, %arg1: i32) -> (i32, i32) {
    %c0_i32 = arith.constant 0 : i32
    return %arg0, %arg1 : i32, i32
  }
  func.func @transform_1(%arg0: i32, %arg1: i32) -> (i32, i32, i32) {
    %c0_i32 = arith.constant 0 : i32
    %c0_i32_0 = arith.constant 0 : i32
    return %arg0, %arg1, %c0_i32 : i32, i32, i32
  }
  func.func @transform_2(%arg0: i32, %arg1: i32) -> (i32, i32) {
    %c0_i32 = arith.constant 0 : i32
    %c0_i32_0 = arith.constant 0 : i32
    %c0_i32_1 = arith.constant 0 : i32
    return %c0_i32, %c0_i32_0 : i32, i32
  }
  func.func @transform_3(%arg0: i32, %arg1: i32) -> (i32, i32) {
    %c0_i32 = arith.constant 0 : i32
    %c0_i32_0 = arith.constant 0 : i32
    return %arg0, %c0_i32 : i32, i32
  }
}

</mosaic_0001>

<llo_original>
// kernel: tpu_custom_call.1
$region0: #{tpu_custom_call.1}
  #allocation0 [shape = 'u32[]', space=smem, size = 0x4, offset = 0x4, fixed_abs, tag = 'smem constant byte address 0x4 - core index']
  #allocation1 [shape = 'u32[144,128]{1,0:T(1,128)}', space=vmem, size = 0x12000, scoped, tag = 'internal scratch']
  #allocation2 [shape = 'f32[2,16]{1,0:T(2,128)}', space=vmem, size = 0x400, scoped, tag = 'scratch operand']
  #allocation3 [shape = 'f32[1,1]{1,0:T(1,128)S(1)}', space=vmem, size = 0x200, scoped, tag = 'scoped memory for tpu_custom_call.1']
  %s0 = inlined_call_operand.vmem [shape: f32[2,256], index: 0, kind: input, shape index: {}]
  %s1 = inlined_call_operand.vmem [shape: bf16[2,256,16], index: 1, kind: input, shape index: {}]
  %s2 = inlined_call_operand.<no memory space> [shape: f32[1,1], index: 2, kind: input, shape index: {}]
  %s3 = inlined_call_operand.hbm [shape: f32[2,16], index: 3, kind: output, shape index: {}]
  %s4 = sld [smem:[#allocation0]]
  $region30: #{tpu_custom_call.1} parent=0
    _
  %s6 = ssub.s32 1, %s4
  %s7 = scalar_select 0, %s6, %s4
  %v8 = vstv %s2
  %9 = vst [vmem:[#allocation3] sm:$0x1] %v8
  $region1: #{tpu_custom_call.1} parent=0
    #allocation4 [shape = 'u8[1024]{0}', space=vmem, size = 0x400, scoped, tag = 'output window, operand 0, single buffered']
    #allocation5 [shape = 's32[1]{0}', space=sflag, size = 0x4, scoped, tag = 'scoped memory for tpu_custom_call.1']
    %10 = vsyncpa [#allocation5], 0
    // Predicated region
    $region2: #{tpu_custom_call.1} parent=1 // pred_check
      _
    $region3: #{tpu_custom_call.1} parent=1 // pred_check_branch
      %12 = sbr.rel (0) target = $region5
    $region4: #{tpu_custom_call.1} parent=1 // pred_region
      _
    $region5: #{tpu_custom_call.1} parent=1 // pred_fallthru
      _
    // Predicated region
    $region6: #{tpu_custom_call.1} parent=1 // pred_check
      _
    $region7: #{tpu_custom_call.1} parent=1 // pred_check_branch
      %14 = sbr.rel (0) target = $region9
    $region8: #{tpu_custom_call.1} parent=1 // pred_region
      _
    $region9: #{tpu_custom_call.1} parent=1 // pred_fallthru
      _
    // Predicated region
    $region10: #{tpu_custom_call.1} parent=1 // pred_check
      _
    $region11: #{tpu_custom_call.1} parent=1 // pred_check_branch
      %16 = sbr.rel (0) target = $region13
    $region12: #{tpu_custom_call.1} parent=1 // pred_region
      _
    $region13: #{tpu_custom_call.1} parent=1 // pred_fallthru
      _
    %p18 = scmp.eq.s32.totalorder 0, 0
    // Predicated region
    $region14: #{tpu_custom_call.1} parent=1 // pred_check
      %p19 = pneg %p18
    $region15: #{tpu_custom_call.1} parent=1 // pred_check_branch
      %21 = sbr.rel (%p19) target = $region17
    $region16: #{tpu_custom_call.1} parent=1 // pred_region
      %vm22 = vcmask 123904
      %23 = vst.msk [vmem:[#allocation2] sm:$0x3] %vm22, 0.0
    $region17: #{tpu_custom_call.1} parent=1 // pred_fallthru
      _
    %v24 = vld [vmem:[%s0] sm:$0xf]
    %v27 = vunpack.c.l.s4 1983009808
    %v28 = vunpack.c.0.s8 %v27
    %v29 = vlaneseq
    %v30 = vshrl.u32 %v29, 7
    %v31 = vsub.s32 %v28, %v30
    %v32 = vrot.slane %v24, %v31
    %v33 = vcombine.high %v32, %v32
    %v36 = vpack.c.bf16 %v32, %v32
    %v37 = vpack.c.bf16 %v33, %v33
    %v40 = vcombine.low %v36, %v37
    %v42 = vunpack.c.l.s4 1966171168
    %v43 = vunpack.c.0.s8 %v42
    %v44 = vlaneseq
    %v45 = vshrl.u32 %v44, 7
    %v46 = vsub.s32 %v43, %v45
    %v47 = vrot.slane %v40, %v46
    %v49 = vunpack.c.l.s4 1966171168
    %v50 = vunpack.c.0.s8 %v49
    %v51 = vlaneseq
    %v52 = vshrl.u32 %v51, 7
    %v53 = vsub.s32 %v50, %v52
    %v54 = vrot.slane %v47, %v53
    %v55 = vunpack.i.l.s16 %v54
    %v56 = vunpack.i.h.s16 %v54
    %v57 = vld [vmem:[%s1] sm:$0xf]
    %v58 = vld [vmem:[%s1 + $0x4] sm:$0xf]
    %v59 = vld [vmem:[%s1 + $0x8] sm:$0xf]
    %v60 = vld [vmem:[%s1 + $0xc] sm:$0xf]
    %v61 = vld [vmem:[%s1 + $0x10] sm:$0xf]
    %v62 = vld [vmem:[%s1 + $0x14] sm:$0xf]
    %v63 = vld [vmem:[%s1 + $0x18] sm:$0xf]
    %v64 = vld [vmem:[%s1 + $0x1c] sm:$0xf]
    %v65 = vld [vmem:[%s1 + $0x20] sm:$0xf]
    %v66 = vld [vmem:[%s1 + $0x24] sm:$0xf]
    %v67 = vld [vmem:[%s1 + $0x28] sm:$0xf]
    %v68 = vld [vmem:[%s1 + $0x2c] sm:$0xf]
    %v69 = vld [vmem:[%s1 + $0x30] sm:$0xf]
    %v70 = vld [vmem:[%s1 + $0x34] sm:$0xf]
    %v71 = vld [vmem:[%s1 + $0x38] sm:$0xf]
    %v72 = vld [vmem:[%s1 + $0x3c] sm:$0xf]
    %v73 = vld [vmem:[%s1 + $0x40] sm:$0xf]
    %v74 = vld [vmem:[%s1 + $0x44] sm:$0xf]
    %v75 = vld [vmem:[%s1 + $0x48] sm:$0xf]
    %v76 = vld [vmem:[%s1 + $0x4c] sm:$0xf]
    %v77 = vld [vmem:[%s1 + $0x50] sm:$0xf]
    %v78 = vld [vmem:[%s1 + $0x54] sm:$0xf]
    %v79 = vld [vmem:[%s1 + $0x58] sm:$0xf]
    %v80 = vld [vmem:[%s1 + $0x5c] sm:$0xf]
    %v81 = vld [vmem:[%s1 + $0x60] sm:$0xf]
    %v82 = vld [vmem:[%s1 + $0x64] sm:$0xf]
    %v83 = vld [vmem:[%s1 + $0x68] sm:$0xf]
    %v84 = vld [vmem:[%s1 + $0x6c] sm:$0xf]
    %v85 = vld [vmem:[%s1 + $0x70] sm:$0xf]
    %v86 = vld [vmem:[%s1 + $0x74] sm:$0xf]
    %v87 = vld [vmem:[%s1 + $0x78] sm:$0xf]
    %v88 = vld [vmem:[%s1 + $0x7c] sm:$0xf]
    %v89 = vld [vmem:[%s1 + $0x80] sm:$0xf]
    %v90 = vld [vmem:[%s1 + $0x84] sm:$0xf]
    %v91 = vld [vmem:[%s1 + $0x88] sm:$0xf]
    %v92 = vld [vmem:[%s1 + $0x8c] sm:$0xf]
    %v93 = vld [vmem:[%s1 + $0x90] sm:$0xf]
    %v94 = vld [vmem:[%s1 + $0x94] sm:$0xf]
    %v95 = vld [vmem:[%s1 + $0x98] sm:$0xf]
    %v96 = vld [vmem:[%s1 + $0x9c] sm:$0xf]
    %v97 = vld [vmem:[%s1 + $0xa0] sm:$0xf]
    %v98 = vld [vmem:[%s1 + $0xa4] sm:$0xf]
    %v99 = vld [vmem:[%s1 + $0xa8] sm:$0xf]
    %v100 = vld [vmem:[%s1 + $0xac] sm:$0xf]
    %v101 = vld [vmem:[%s1 + $0xb0] sm:$0xf]
    %v102 = vld [vmem:[%s1 + $0xb4] sm:$0xf]
    %v103 = vld [vmem:[%s1 + $0xb8] sm:$0xf]
    %v104 = vld [vmem:[%s1 + $0xbc] sm:$0xf]
    %v105 = vld [vmem:[%s1 + $0xc0] sm:$0xf]
    %v106 = vld [vmem:[%s1 + $0xc4] sm:$0xf]
    %v107 = vld [vmem:[%s1 + $0xc8] sm:$0xf]
    %v108 = vld [vmem:[%s1 + $0xcc] sm:$0xf]
    %v109 = vld [vmem:[%s1 + $0xd0] sm:$0xf]
    %v110 = vld [vmem:[%s1 + $0xd4] sm:$0xf]
    %v111 = vld [vmem:[%s1 + $0xd8] sm:$0xf]
    %v112 = vld [vmem:[%s1 + $0xdc] sm:$0xf]
    %v113 = vld [vmem:[%s1 + $0xe0] sm:$0xf]
    %v114 = vld [vmem:[%s1 + $0xe4] sm:$0xf]
    %v115 = vld [vmem:[%s1 + $0xe8] sm:$0xf]
    %v116 = vld [vmem:[%s1 + $0xec] sm:$0xf]
    %v117 = vld [vmem:[%s1 + $0xf0] sm:$0xf]
    %v118 = vld [vmem:[%s1 + $0xf4] sm:$0xf]
    %v119 = vld [vmem:[%s1 + $0xf8] sm:$0xf]
    %v120 = vld [vmem:[%s1 + $0xfc] sm:$0xf]
    %v121 = vpack.i.b16 %v55, %v55
    %v122 = vlaneseq
    %v123 = vshrl.u32 %v122, 7
    %v124 = vsub.s32 0, %v123
    %v125 = vrot.slane %v121, %v124
    %v126 = vlaneseq
    %v127 = vshrl.u32 %v126, 7
    %v128 = vsub.s32 1, %v127
    %v129 = vrot.slane %v121, %v128
    %v164 = vunpack.c.l.b16 %v57
    %v165 = vunpack.c.l.b16 %v58
    %v166 = vunpack.c.l.b16 %v59
    %v167 = vunpack.c.l.b16 %v60
    %v168 = vunpack.c.l.b16 %v61
    %v169 = vunpack.c.l.b16 %v62
    %v170 = vunpack.c.l.b16 %v63
    %v171 = vunpack.c.l.b16 %v64
    %v172 = vunpack.c.l.b16 %v65
    %v173 = vunpack.c.l.b16 %v66
    %v174 = vunpack.c.l.b16 %v67
    %v175 = vunpack.c.l.b16 %v68
    %v176 = vunpack.c.l.b16 %v69
    %v177 = vunpack.c.l.b16 %v70
    %v178 = vunpack.c.l.b16 %v71
    %v179 = vunpack.c.l.b16 %v72
    %v180 = vunpack.c.l.b16 %v73
    %v181 = vunpack.c.l.b16 %v74
    %v182 = vunpack.c.l.b16 %v75
    %v183 = vunpack.c.l.b16 %v76
    %v184 = vunpack.c.l.b16 %v77
    %v185 = vunpack.c.l.b16 %v78
    %v186 = vunpack.c.l.b16 %v79
    %v187 = vunpack.c.l.b16 %v80
    %v188 = vunpack.c.l.b16 %v81
    %v189 = vunpack.c.l.b16 %v82
    %v190 = vunpack.c.l.b16 %v83
    %v191 = vunpack.c.l.b16 %v84
    %v192 = vunpack.c.l.b16 %v85
    %v193 = vunpack.c.l.b16 %v86
    %v194 = vunpack.c.l.b16 %v87
    %v195 = vunpack.c.l.b16 %v88
    %v196 = vpack.c.b16 %v165, %v164
    %v197 = vpack.c.b16 %v167, %v166
    %v198 = vpack.c.b16 %v169, %v168
    %v199 = vpack.c.b16 %v171, %v170
    %v200 = vpack.c.b16 %v173, %v172
    %v201 = vpack.c.b16 %v175, %v174
    %v202 = vpack.c.b16 %v177, %v176
    %v203 = vpack.c.b16 %v179, %v178
    %v204 = vpack.c.b16 %v181, %v180
    %v205 = vpack.c.b16 %v183, %v182
    %v206 = vpack.c.b16 %v185, %v184
    %v207 = vpack.c.b16 %v187, %v186
    %v208 = vpack.c.b16 %v189, %v188
    %v209 = vpack.c.b16 %v191, %v190
    %v210 = vpack.c.b16 %v193, %v192
    %v211 = vpack.c.b16 %v195, %v194
    %228 = vmatprep.subr.bf16.mxu0 0
    %229 = vmatpush1.bf16.msra.mxu0 %v203
    %230 = vmatprep.subr.bf16.mxu0 0
    %231 = vmatpush1.bf16.msra.mxu0 %v202
    %232 = vmatprep.subr.bf16.mxu0 0
    %233 = vmatpush1.bf16.msra.mxu0 %v201
    %234 = vmatprep.subr.bf16.mxu0 0
    %235 = vmatpush1.bf16.msra.mxu0 %v200
    %236 = vmatprep.subr.bf16.mxu0 0
    %237 = vmatpush1.bf16.msra.mxu0 %v199
    %238 = vmatprep.subr.bf16.mxu0 0
    %239 = vmatpush1.bf16.msra.mxu0 %v198
    %240 = vmatprep.subr.bf16.mxu0 0
    %241 = vmatpush1.bf16.msra.mxu0 %v197
    %242 = vmatprep.subr.bf16.mxu0 0
    %243 = vmatpush1.bf16.msra.mxu0 %v196
    %244 = vmatprep.subr.bf16.mxu0 0
    %245 = vmatpush2.bf16.msra.mxu0 %v211
    %246 = vmatprep.subr.bf16.mxu0 0
    %247 = vmatpush2.bf16.msra.mxu0 %v210
    %248 = vmatprep.subr.bf16.mxu0 0
    %249 = vmatpush2.bf16.msra.mxu0 %v209
    %250 = vmatprep.subr.bf16.mxu0 0
    %251 = vmatpush2.bf16.msra.mxu0 %v208
    %252 = vmatprep.subr.bf16.mxu0 0
    %253 = vmatpush2.bf16.msra.mxu0 %v207
    %254 = vmatprep.subr.bf16.mxu0 0
    %255 = vmatpush2.bf16.msra.mxu0 %v206
    %256 = vmatprep.subr.bf16.mxu0 0
    %257 = vmatpush2.bf16.msra.mxu0 %v205
    %258 = vmatprep.subr.bf16.mxu0 0
    %259 = vmatpush2.bf16.msra.mxu0 %v204
    %260 = vmatprep.mubr.bf16.mxu0 %v129
    %261 = vmatmul.mubr.bf16.gmra.mxu0 %v125
    %v262 = vpop.f32.mrf.mxu0
    %v263 = vadd.f32 0.0, %v262
    %v264 = vpop.f32.mrf.mxu0
    %v265 = vpop.f32.mrf.mxu0
    %v266 = vpop.f32.mrf.mxu0
    %267 = vdwg.mxu0
    %v268 = vpack.i.b16 %v56, %v56
    %v269 = vlaneseq
    %v270 = vshrl.u32 %v269, 7
    %v271 = vsub.s32 0, %v270
    %v272 = vrot.slane %v268, %v271
    %v273 = vlaneseq
    %v274 = vshrl.u32 %v273, 7
    %v275 = vsub.s32 1, %v274
    %v276 = vrot.slane %v268, %v275
    %v311 = vunpack.c.l.b16 %v89
    %v312 = vunpack.c.l.b16 %v90
    %v313 = vunpack.c.l.b16 %v91
    %v314 = vunpack.c.l.b16 %v92
    %v315 = vunpack.c.l.b16 %v93
    %v316 = vunpack.c.l.b16 %v94
    %v317 = vunpack.c.l.b16 %v95
    %v318 = vunpack.c.l.b16 %v96
    %v319 = vunpack.c.l.b16 %v97
    %v320 = vunpack.c.l.b16 %v98
    %v321 = vunpack.c.l.b16 %v99
    %v322 = vunpack.c.l.b16 %v100
    %v323 = vunpack.c.l.b16 %v101
    %v324 = vunpack.c.l.b16 %v102
    %v325 = vunpack.c.l.b16 %v103
    %v326 = vunpack.c.l.b16 %v104
    %v327 = vunpack.c.l.b16 %v105
    %v328 = vunpack.c.l.b16 %v106
    %v329 = vunpack.c.l.b16 %v107
    %v330 = vunpack.c.l.b16 %v108
    %v331 = vunpack.c.l.b16 %v109
    %v332 = vunpack.c.l.b16 %v110
    %v333 = vunpack.c.l.b16 %v111
    %v334 = vunpack.c.l.b16 %v112
    %v335 = vunpack.c.l.b16 %v113
    %v336 = vunpack.c.l.b16 %v114
    %v337 = vunpack.c.l.b16 %v115
    %v338 = vunpack.c.l.b16 %v116
    %v339 = vunpack.c.l.b16 %v117
    %v340 = vunpack.c.l.b16 %v118
    %v341 = vunpack.c.l.b16 %v119
    %v342 = vunpack.c.l.b16 %v120
    %v343 = vpack.c.b16 %v312, %v311
    %v344 = vpack.c.b16 %v314, %v313
    %v345 = vpack.c.b16 %v316, %v315
    %v346 = vpack.c.b16 %v318, %v317
    %v347 = vpack.c.b16 %v320, %v319
    %v348 = vpack.c.b16 %v322, %v321
    %v349 = vpack.c.b16 %v324, %v323
    %v350 = vpack.c.b16 %v326, %v325
    %v351 = vpack.c.b16 %v328, %v327
    %v352 = vpack.c.b16 %v330, %v329
    %v353 = vpack.c.b16 %v332, %v331
    %v354 = vpack.c.b16 %v334, %v333
    %v355 = vpack.c.b16 %v336, %v335
    %v356 = vpack.c.b16 %v338, %v337
    %v357 = vpack.c.b16 %v340, %v339
    %v358 = vpack.c.b16 %v342, %v341
    %375 = vmatprep.subr.bf16.mxu0 0
    %376 = vmatpush1.bf16.msra.mxu0 %v350
    %377 = vmatprep.subr.bf16.mxu0 0
    %378 = vmatpush1.bf16.msra.mxu0 %v349
    %379 = vmatprep.subr.bf16.mxu0 0
    %380 = vmatpush1.bf16.msra.mxu0 %v348
    %381 = vmatprep.subr.bf16.mxu0 0
    %382 = vmatpush1.bf16.msra.mxu0 %v347
    %383 = vmatprep.subr.bf16.mxu0 0
    %384 = vmatpush1.bf16.msra.mxu0 %v346
    %385 = vmatprep.subr.bf16.mxu0 0
    %386 = vmatpush1.bf16.msra.mxu0 %v345
    %387 = vmatprep.subr.bf16.mxu0 0
    %388 = vmatpush1.bf16.msra.mxu0 %v344
    %389 = vmatprep.subr.bf16.mxu0 0
    %390 = vmatpush1.bf16.msra.mxu0 %v343
    %391 = vmatprep.subr.bf16.mxu0 0
    %392 = vmatpush2.bf16.msra.mxu0 %v358
    %393 = vmatprep.subr.bf16.mxu0 0
    %394 = vmatpush2.bf16.msra.mxu0 %v357
    %395 = vmatprep.subr.bf16.mxu0 0
    %396 = vmatpush2.bf16.msra.mxu0 %v356
    %397 = vmatprep.subr.bf16.mxu0 0
    %398 = vmatpush2.bf16.msra.mxu0 %v355
    %399 = vmatprep.subr.bf16.mxu0 0
    %400 = vmatpush2.bf16.msra.mxu0 %v354
    %401 = vmatprep.subr.bf16.mxu0 0
    %402 = vmatpush2.bf16.msra.mxu0 %v353
    %403 = vmatprep.subr.bf16.mxu0 0
    %404 = vmatpush2.bf16.msra.mxu0 %v352
    %405 = vmatprep.subr.bf16.mxu0 0
    %406 = vmatpush2.bf16.msra.mxu0 %v351
    %407 = vmatprep.mubr.bf16.mxu0 %v276
    %408 = vmatmul.mubr.bf16.gmra.mxu0 %v272
    %v409 = vpop.f32.mrf.mxu0
    %v410 = vadd.f32 0.0, %v409
    %v411 = vpop.f32.mrf.mxu0
    %v412 = vpop.f32.mrf.mxu0
    %v413 = vpop.f32.mrf.mxu0
    %414 = vdwg.mxu0
    %v415 = vld [vmem:[#allocation2] sm:$0x3]
    %v418 = vrot.slane %v410, 7
    %vm419 = vcmask 1041409
    %v420 = vsel %vm419, %v418, %v263
    %v422 = vadd.f32 %v415, %v420
    %vm423 = vcmask 123904
    %424 = vst.msk [vmem:[#allocation2] sm:$0x3] %vm423, %v422
    // Predicated region
    $region18: #{tpu_custom_call.1} parent=1 // pred_check
      %p425 = pneg %p18
    $region19: #{tpu_custom_call.1} parent=1 // pred_check_branch
      %427 = sbr.rel (%p425) target = $region21
    $region20: #{tpu_custom_call.1} parent=1 // pred_region
      %v428 = vld [vmem:[#allocation2] sm:$0x3]
      %v429 = vld [vmem:[#allocation3] sm:$0x1]
      %v431 = vlaneseq
      %v432 = vshrl.u32 %v431, 7
      %v433 = vsub.s32 0, %v432
      %v434 = vrot.slane %v429, %v433
      %435 = vset.pattern.permute.xlu0 0
      %436 = vperm.xlu0 %435, %v434
      %v437 = vpop.permute.xlu0 %436
      %v439 = vadd.f32 %v428, %v437
      %440 = vst.msk [vmem:[#allocation4] sm:$0x3] %vm423, %v439
    $region21: #{tpu_custom_call.1} parent=1 // pred_fallthru
      _
    // Predicated region
    $region22: #{tpu_custom_call.1} parent=1 // pred_check
      _
    $region23: #{tpu_custom_call.1} parent=1 // pred_check_branch
      %442 = sbr.rel (0) target = $region25
    $region24: #{tpu_custom_call.1} parent=1 // pred_region
      %s444 = ssub.s32 32, 32
      %445 = vsyncadd [#allocation5], %s444
      %s447 = sshll.u32 [#allocation4], 4
      %s448 = int_to_ptr.vmem [resolvable:$true] %s447
      %450 = dma.vmem_to_hbm [thread:$0]  %s448, 32, %s3, [#allocation5]
    $region25: #{tpu_custom_call.1} parent=1 // pred_fallthru
      _
    // Predicated region
    $region26: #{tpu_custom_call.1} parent=1 // pred_check
      _
    $region27: #{tpu_custom_call.1} parent=1 // pred_check_branch
      %452 = sbr.rel (0) target = $region29
    $region28: #{tpu_custom_call.1} parent=1 // pred_region
      %453 = dma.done [#allocation5], 32
    $region29: #{tpu_custom_call.1} parent=1 // pred_fallthru
      _
    %454 = vsyncpa [#allocation5], 1

</llo_original>
